<compile_context>
chip_gen: v7x
topology: tpu7x:2x2x1
jax: 0.10.0
libtpu: 0.0.40
codegen_flags: <defaults>
</compile_context>

<pallas_src>
import jax
import jax.numpy as jnp
from jax.experimental import pallas as pl
from jax.experimental.pallas import tpu as pltpu

EPS = 1e-6                 # torch.nn.PairwiseDistance default (added to the difference)
_ROW_UNROLL_CAP = 256      # bounds the static per-row unroll inside the kernel


def _round_up(v: int, m: int) -> int:
    return (v + m - 1) // m * m


def _vmem_budget():
    """(vmem_limit_bytes, per-input per-buffer target block bytes), generation-aware."""
    try:
        kind = jax.devices()[0].device_kind.lower()
    except Exception:
        kind = ""
    if "v5" in kind or "v6" in kind:
        # 128 MiB physical VMEM: bigger blocks push past the ~85% HBM-roofline knee.
        return 80 * 1024 * 1024, 14 * 1024 * 1024
    # v7x (64 MiB physical VMEM per TC) or unknown: stay conservative.
    return 48 * 1024 * 1024, 10 * 1024 * 1024


def _choose_tiling(C: int, N: int, D: int, target_block_bytes: int):
    """Pick (cb, nt): classes per block and rows per feature chunk.

    VMEM for one input block of the lane-dense (C, N*D) view (f32, (8,128) tiling):
        round_up(cb, 8) * round_up(nt*D, 128) * 4 bytes.
    """
    def blk_bytes(cb: int, nt: int) -> int:
        return _round_up(cb, 8) * _round_up(nt * D, 128) * 4

    # Rows per chunk: a whole class if it fits (common case); otherwise the largest
    # divisor of N that fits with one class per block, preferring 128-lane-aligned
    # chunk widths so interior blocks stay unmasked.
    if blk_bytes(1, N) <= target_block_bytes and N <= _ROW_UNROLL_CAP:
        nt = N
    else:
        cands = [c for c in range(1, min(N, _ROW_UNROLL_CAP) + 1)
                 if N % c == 0 and blk_bytes(1, c) <= target_block_bytes]
        aligned = [c for c in cands if (c * D) % 128 == 0]
        nt = max(aligned) if aligned else (max(cands) if cands else 1)

    # Classes per block: as many as fit the budget (sublane round-up aware) while
    # keeping cb a divisor of C (no input padding / no HBM copy).
    q = target_block_bytes // (_round_up(nt * D, 128) * 4)   # bound on round_up(cb, 8)
    cb_max = (q // 8) * 8 if q >= 8 else 1
    cb_max = min(max(cb_max, 1), C)
    # v7x megacore: keep >= 2 grid steps over classes when there are enough classes,
    # so dimension_semantics=("parallel", ...) can shard them over both TensorCores.
    if C >= 16:
        cb_max = min(cb_max, max(8, _round_up(C // 2, 8)))
    if cb_max >= C:
        cb = C
    else:
        divs = [d for d in range(1, cb_max + 1) if C % d == 0]
        mult8 = [d for d in divs if d % 8 == 0]   # prefer sublane-aligned class blocks
        cb = max(mult8) if mult8 else max(divs)
    return cb, nt


def _make_kernel(nt: int, D: int):
    def kernel(x_ref, y_ref, o_ref, m_ref):
        k = pl.program_id(1)

        @pl.when(k == 0)
        def _init():
            m_ref[...] = jnp.full_like(m_ref, -jnp.inf)

        # Running max (over rows) of the squared row distance for each class in the
        # block.  Each row is a contiguous D-lane slice of the lane-dense block; the
        # per-row sum is an exact f32 lane reduction (VPU/XLU filler — the kernel is
        # HBM-bandwidth-bound, so this work is hidden under the DMA).
        m = m_ref[...]                                         # (cb, 1)
        for r in range(nt):                                    # static unroll (<= _ROW_UNROLL_CAP)
            sl = pl.ds(r * D, D)
            d = (x_ref[:, sl].astype(jnp.float32)
                 - y_ref[:, sl].astype(jnp.float32) + EPS)     # (cb, D)
            m = jnp.maximum(m, jnp.sum(d * d, axis=-1, keepdims=True))
        m_ref[...] = m

        @pl.when(k == pl.num_programs(1) - 1)
        def _store():
            o_ref[0] = m_ref[...]                              # (cb, 1) block of (nb, cb, 1)

    return kernel


def custom_hf95(x, y):
    """x, y: [C, N, D].  Returns scalar f32 = mean_c max_n ||x[c,n] - y[c,n] + eps||_2."""
    assert x.shape == y.shape and x.ndim == 3
    C, N, D = x.shape
    vmem_limit, target_block_bytes = _vmem_budget()
    cb, nt = _choose_tiling(C, N, D, target_block_bytes)
    nb, kt = C // cb, N // nt

    # Lane-dense view: last dim N*D (multiple of 128 here) instead of D=32, so blocks
    # carry no 128/D lane padding.  This is a wrapper-side layout change, not compute.
    xf = x.reshape(C, N * D)
    yf = y.reshape(C, N * D)

    cost = pl.CostEstimate(
        flops=4 * C * N * D + C * N,                 # sub, +eps, square, add-reduce, max
        transcendentals=0,
        bytes_accessed=2 * C * N * D * x.dtype.itemsize + C * 4,
    )

    out_blocks = pl.pallas_call(
        _make_kernel(nt, D),
        out_shape=jax.ShapeDtypeStruct((nb, cb, 1), jnp.float32),
        grid_spec=pltpu.PrefetchScalarGridSpec(
            num_scalar_prefetch=0,
            grid=(nb, kt),                           # reduction (row-chunk) axis last
            in_specs=[
                pl.BlockSpec((cb, nt * D), lambda i, k: (i, k)),
                pl.BlockSpec((cb, nt * D), lambda i, k: (i, k)),
            ],
            out_specs=pl.BlockSpec((1, cb, 1), lambda i, k: (i, 0, 0)),
            scratch_shapes=[pltpu.VMEM((cb, 1), jnp.float32)],  # running max of sq dist
        ),
        compiler_params=pltpu.CompilerParams(
            dimension_semantics=("parallel", "arbitrary"),
            vmem_limit_bytes=vmem_limit,
        ),
        cost_estimate=cost,
    )(xf, yf)

    per_class_max_sq = out_blocks.reshape(-1)        # (C,): cb divides C, nothing to drop
    # sqrt hoisted out of the max (monotone on >= 0); sqrt + mean once, in the wrapper.
    return jnp.mean(jnp.sqrt(per_class_max_sq))


def _reference(x, y):
    d = x.astype(jnp.float32) - y.astype(jnp.float32) + EPS
    dist = jnp.sqrt(jnp.sum(d * d, axis=-1))         # (C, N)
    return jnp.mean(jnp.max(dist, axis=-1))          # mean over classes of per-class max


if __name__ == "__main__":
    # num_classes in the torch module is an iterable of class indices; here range(C).
    C, N, D = 4, 16, 32
    key = jax.random.PRNGKey(0)
    kx, ky = jax.random.split(key)
    x = jax.random.normal(kx, (C, N, D), dtype=jnp.float32)
    y = jax.random.normal(ky, (C, N, D), dtype=jnp.float32)

    result = jax.block_until_ready(custom_hf95(x, y))
    ref = jax.block_until_ready(_reference(x, y))
    assert jnp.allclose(result, ref, rtol=1e-5, atol=1e-5), (result, ref)
    print("KERNEL_OK")
</pallas_src>

<mosaic_0001>
module attributes {stable_mosaic.version = 11 : i64} {
  func.func @kernel(%arg0: i32, %arg1: i32, %arg2: memref<4x512xf32, #tpu.memory_space<vmem>>, %arg3: memref<4x512xf32, #tpu.memory_space<vmem>>, %arg4: memref<1x4x1xf32, #tpu.memory_space<vmem>>, %arg5: memref<4x1xf32, #tpu.memory_space<vmem>>) attributes {dimension_semantics = [#tpu.dimension_semantics<parallel>, #tpu.dimension_semantics<arbitrary>], iteration_bounds = array<i64: 1, 1>, scalar_prefetch = 0 : i64, scratch_operands = 1 : i64, tpu.core_type = #tpu.core_type<tc>, window_params = [{transform_indices = @transform_0, window_bounds = array<i64: 4, 512>}, {transform_indices = @transform_1, window_bounds = array<i64: 4, 512>}, {transform_indices = @transform_2, window_bounds = array<i64: 1, 4, 1>}]} {
    %c0_i32 = arith.constant 0 : i32
    %0 = arith.cmpi eq, %arg1, %c0_i32 : i32
    %1 = arith.extui %0 : i1 to i32
    %c0_i32_0 = arith.constant 0 : i32
    %2 = arith.cmpi ne, %1, %c0_i32_0 : i32
    scf.if %2 {
      %cst_86 = arith.constant 0xFF800000 : f32
      %152 = vector.broadcast %cst_86 : f32 to vector<4x1xf32>
      %c0_87 = arith.constant 0 : index
      %c0_88 = arith.constant 0 : index
      %153 = vector.load %arg5[%c0_87, %c0_88] : memref<4x1xf32, #tpu.memory_space<vmem>>, vector<4x1xf32>
      tpu.vector_store %arg5[%c0_87, %c0_88], %152 {strides = array<i32>} : memref<4x1xf32, #tpu.memory_space<vmem>>, vector<4x1xf32>,
    } else {
    }
    %c0 = arith.constant 0 : index
    %c0_1 = arith.constant 0 : index
    %3 = vector.load %arg5[%c0, %c0_1] : memref<4x1xf32, #tpu.memory_space<vmem>>, vector<4x1xf32>
    %c0_2 = arith.constant 0 : index
    %c0_3 = arith.constant 0 : index
    %4 = vector.load %arg2[%c0_2, %c0_3] : memref<4x512xf32, #tpu.memory_space<vmem>>, vector<4x32xf32>
    %c0_4 = arith.constant 0 : index
    %c0_5 = arith.constant 0 : index
    %5 = vector.load %arg3[%c0_4, %c0_5] : memref<4x512xf32, #tpu.memory_space<vmem>>, vector<4x32xf32>
    %6 = arith.subf %4, %5 : vector<4x32xf32>
    %cst = arith.constant 9.99999997E-7 : f32
    %7 = vector.broadcast %cst : f32 to vector<4x32xf32>
    %8 = arith.addf %6, %7 : vector<4x32xf32>
    %9 = arith.mulf %8, %8 : vector<4x32xf32>
    %cst_6 = arith.constant dense<0.000000e+00> : vector<4xf32>
    %10 = vector.multi_reduction <add>, %9, %cst_6 [1] : vector<4x32xf32> to vector<4xf32>
    %11 = vector.shape_cast %10 : vector<4xf32> to vector<4x1xf32>
    %12 = arith.maximumf %3, %11 : vector<4x1xf32>
    %c0_7 = arith.constant 0 : index
    %c32 = arith.constant 32 : index
    %13 = vector.load %arg2[%c0_7, %c32] : memref<4x512xf32, #tpu.memory_space<vmem>>, vector<4x32xf32>
    %c0_8 = arith.constant 0 : index
    %c32_9 = arith.constant 32 : index
    %14 = vector.load %arg3[%c0_8, %c32_9] : memref<4x512xf32, #tpu.memory_space<vmem>>, vector<4x32xf32>
    %15 = arith.subf %13, %14 : vector<4x32xf32>
    %cst_10 = arith.constant 9.99999997E-7 : f32
    %16 = vector.broadcast %cst_10 : f32 to vector<4x32xf32>
    %17 = arith.addf %15, %16 : vector<4x32xf32>
    %18 = arith.mulf %17, %17 : vector<4x32xf32>
    %cst_11 = arith.constant dense<0.000000e+00> : vector<4xf32>
    %19 = vector.multi_reduction <add>, %18, %cst_11 [1] : vector<4x32xf32> to vector<4xf32>
    %20 = vector.shape_cast %19 : vector<4xf32> to vector<4x1xf32>
    %21 = arith.maximumf %12, %20 : vector<4x1xf32>
    %c0_12 = arith.constant 0 : index
    %c64 = arith.constant 64 : index
    %22 = vector.load %arg2[%c0_12, %c64] : memref<4x512xf32, #tpu.memory_space<vmem>>, vector<4x32xf32>
    %c0_13 = arith.constant 0 : index
    %c64_14 = arith.constant 64 : index
    %23 = vector.load %arg3[%c0_13, %c64_14] : memref<4x512xf32, #tpu.memory_space<vmem>>, vector<4x32xf32>
    %24 = arith.subf %22, %23 : vector<4x32xf32>
    %cst_15 = arith.constant 9.99999997E-7 : f32
    %25 = vector.broadcast %cst_15 : f32 to vector<4x32xf32>
    %26 = arith.addf %24, %25 : vector<4x32xf32>
    %27 = arith.mulf %26, %26 : vector<4x32xf32>
    %cst_16 = arith.constant dense<0.000000e+00> : vector<4xf32>
    %28 = vector.multi_reduction <add>, %27, %cst_16 [1] : vector<4x32xf32> to vector<4xf32>
    %29 = vector.shape_cast %28 : vector<4xf32> to vector<4x1xf32>
    %30 = arith.maximumf %21, %29 : vector<4x1xf32>
    %c0_17 = arith.constant 0 : index
    %c96 = arith.constant 96 : index
    %31 = vector.load %arg2[%c0_17, %c96] : memref<4x512xf32, #tpu.memory_space<vmem>>, vector<4x32xf32>
    %c0_18 = arith.constant 0 : index
    %c96_19 = arith.constant 96 : index
    %32 = vector.load %arg3[%c0_18, %c96_19] : memref<4x512xf32, #tpu.memory_space<vmem>>, vector<4x32xf32>
    %33 = arith.subf %31, %32 : vector<4x32xf32>
    %cst_20 = arith.constant 9.99999997E-7 : f32
    %34 = vector.broadcast %cst_20 : f32 to vector<4x32xf32>
    %35 = arith.addf %33, %34 : vector<4x32xf32>
    %36 = arith.mulf %35, %35 : vector<4x32xf32>
    %cst_21 = arith.constant dense<0.000000e+00> : vector<4xf32>
    %37 = vector.multi_reduction <add>, %36, %cst_21 [1] : vector<4x32xf32> to vector<4xf32>
    %38 = vector.shape_cast %37 : vector<4xf32> to vector<4x1xf32>
    %39 = arith.maximumf %30, %38 : vector<4x1xf32>
    %c0_22 = arith.constant 0 : index
    %c128 = arith.constant 128 : index
    %40 = vector.load %arg2[%c0_22, %c128] : memref<4x512xf32, #tpu.memory_space<vmem>>, vector<4x32xf32>
    %c0_23 = arith.constant 0 : index
    %c128_24 = arith.constant 128 : index
    %41 = vector.load %arg3[%c0_23, %c128_24] : memref<4x512xf32, #tpu.memory_space<vmem>>, vector<4x32xf32>
    %42 = arith.subf %40, %41 : vector<4x32xf32>
    %cst_25 = arith.constant 9.99999997E-7 : f32
    %43 = vector.broadcast %cst_25 : f32 to vector<4x32xf32>
    %44 = arith.addf %42, %43 : vector<4x32xf32>
    %45 = arith.mulf %44, %44 : vector<4x32xf32>
    %cst_26 = arith.constant dense<0.000000e+00> : vector<4xf32>
    %46 = vector.multi_reduction <add>, %45, %cst_26 [1] : vector<4x32xf32> to vector<4xf32>
    %47 = vector.shape_cast %46 : vector<4xf32> to vector<4x1xf32>
    %48 = arith.maximumf %39, %47 : vector<4x1xf32>
    %c0_27 = arith.constant 0 : index
    %c160 = arith.constant 160 : index
    %49 = vector.load %arg2[%c0_27, %c160] : memref<4x512xf32, #tpu.memory_space<vmem>>, vector<4x32xf32>
    %c0_28 = arith.constant 0 : index
    %c160_29 = arith.constant 160 : index
    %50 = vector.load %arg3[%c0_28, %c160_29] : memref<4x512xf32, #tpu.memory_space<vmem>>, vector<4x32xf32>
    %51 = arith.subf %49, %50 : vector<4x32xf32>
    %cst_30 = arith.constant 9.99999997E-7 : f32
    %52 = vector.broadcast %cst_30 : f32 to vector<4x32xf32>
    %53 = arith.addf %51, %52 : vector<4x32xf32>
    %54 = arith.mulf %53, %53 : vector<4x32xf32>
    %cst_31 = arith.constant dense<0.000000e+00> : vector<4xf32>
    %55 = vector.multi_reduction <add>, %54, %cst_31 [1] : vector<4x32xf32> to vector<4xf32>
    %56 = vector.shape_cast %55 : vector<4xf32> to vector<4x1xf32>
    %57 = arith.maximumf %48, %56 : vector<4x1xf32>
    %c0_32 = arith.constant 0 : index
    %c192 = arith.constant 192 : index
    %58 = vector.load %arg2[%c0_32, %c192] : memref<4x512xf32, #tpu.memory_space<vmem>>, vector<4x32xf32>
    %c0_33 = arith.constant 0 : index
    %c192_34 = arith.constant 192 : index
    %59 = vector.load %arg3[%c0_33, %c192_34] : memref<4x512xf32, #tpu.memory_space<vmem>>, vector<4x32xf32>
    %60 = arith.subf %58, %59 : vector<4x32xf32>
    %cst_35 = arith.constant 9.99999997E-7 : f32
    %61 = vector.broadcast %cst_35 : f32 to vector<4x32xf32>
    %62 = arith.addf %60, %61 : vector<4x32xf32>
    %63 = arith.mulf %62, %62 : vector<4x32xf32>
    %cst_36 = arith.constant dense<0.000000e+00> : vector<4xf32>
    %64 = vector.multi_reduction <add>, %63, %cst_36 [1] : vector<4x32xf32> to vector<4xf32>
    %65 = vector.shape_cast %64 : vector<4xf32> to vector<4x1xf32>
    %66 = arith.maximumf %57, %65 : vector<4x1xf32>
    %c0_37 = arith.constant 0 : index
    %c224 = arith.constant 224 : index
    %67 = vector.load %arg2[%c0_37, %c224] : memref<4x512xf32, #tpu.memory_space<vmem>>, vector<4x32xf32>
    %c0_38 = arith.constant 0 : index
    %c224_39 = arith.constant 224 : index
    %68 = vector.load %arg3[%c0_38, %c224_39] : memref<4x512xf32, #tpu.memory_space<vmem>>, vector<4x32xf32>
    %69 = arith.subf %67, %68 : vector<4x32xf32>
    %cst_40 = arith.constant 9.99999997E-7 : f32
    %70 = vector.broadcast %cst_40 : f32 to vector<4x32xf32>
    %71 = arith.addf %69, %70 : vector<4x32xf32>
    %72 = arith.mulf %71, %71 : vector<4x32xf32>
    %cst_41 = arith.constant dense<0.000000e+00> : vector<4xf32>
    %73 = vector.multi_reduction <add>, %72, %cst_41 [1] : vector<4x32xf32> to vector<4xf32>
    %74 = vector.shape_cast %73 : vector<4xf32> to vector<4x1xf32>
    %75 = arith.maximumf %66, %74 : vector<4x1xf32>
    %c0_42 = arith.constant 0 : index
    %c256 = arith.constant 256 : index
    %76 = vector.load %arg2[%c0_42, %c256] : memref<4x512xf32, #tpu.memory_space<vmem>>, vector<4x32xf32>
    %c0_43 = arith.constant 0 : index
    %c256_44 = arith.constant 256 : index
    %77 = vector.load %arg3[%c0_43, %c256_44] : memref<4x512xf32, #tpu.memory_space<vmem>>, vector<4x32xf32>
    %78 = arith.subf %76, %77 : vector<4x32xf32>
    %cst_45 = arith.constant 9.99999997E-7 : f32
    %79 = vector.broadcast %cst_45 : f32 to vector<4x32xf32>
    %80 = arith.addf %78, %79 : vector<4x32xf32>
    %81 = arith.mulf %80, %80 : vector<4x32xf32>
    %cst_46 = arith.constant dense<0.000000e+00> : vector<4xf32>
    %82 = vector.multi_reduction <add>, %81, %cst_46 [1] : vector<4x32xf32> to vector<4xf32>
    %83 = vector.shape_cast %82 : vector<4xf32> to vector<4x1xf32>
    %84 = arith.maximumf %75, %83 : vector<4x1xf32>
    %c0_47 = arith.constant 0 : index
    %c288 = arith.constant 288 : index
    %85 = vector.load %arg2[%c0_47, %c288] : memref<4x512xf32, #tpu.memory_space<vmem>>, vector<4x32xf32>
    %c0_48 = arith.constant 0 : index
    %c288_49 = arith.constant 288 : index
    %86 = vector.load %arg3[%c0_48, %c288_49] : memref<4x512xf32, #tpu.memory_space<vmem>>, vector<4x32xf32>
    %87 = arith.subf %85, %86 : vector<4x32xf32>
    %cst_50 = arith.constant 9.99999997E-7 : f32
    %88 = vector.broadcast %cst_50 : f32 to vector<4x32xf32>
    %89 = arith.addf %87, %88 : vector<4x32xf32>
    %90 = arith.mulf %89, %89 : vector<4x32xf32>
    %cst_51 = arith.constant dense<0.000000e+00> : vector<4xf32>
    %91 = vector.multi_reduction <add>, %90, %cst_51 [1] : vector<4x32xf32> to vector<4xf32>
    %92 = vector.shape_cast %91 : vector<4xf32> to vector<4x1xf32>
    %93 = arith.maximumf %84, %92 : vector<4x1xf32>
    %c0_52 = arith.constant 0 : index
    %c320 = arith.constant 320 : index
    %94 = vector.load %arg2[%c0_52, %c320] : memref<4x512xf32, #tpu.memory_space<vmem>>, vector<4x32xf32>
    %c0_53 = arith.constant 0 : index
    %c320_54 = arith.constant 320 : index
    %95 = vector.load %arg3[%c0_53, %c320_54] : memref<4x512xf32, #tpu.memory_space<vmem>>, vector<4x32xf32>
    %96 = arith.subf %94, %95 : vector<4x32xf32>
    %cst_55 = arith.constant 9.99999997E-7 : f32
    %97 = vector.broadcast %cst_55 : f32 to vector<4x32xf32>
    %98 = arith.addf %96, %97 : vector<4x32xf32>
    %99 = arith.mulf %98, %98 : vector<4x32xf32>
    %cst_56 = arith.constant dense<0.000000e+00> : vector<4xf32>
    %100 = vector.multi_reduction <add>, %99, %cst_56 [1] : vector<4x32xf32> to vector<4xf32>
    %101 = vector.shape_cast %100 : vector<4xf32> to vector<4x1xf32>
    %102 = arith.maximumf %93, %101 : vector<4x1xf32>
    %c0_57 = arith.constant 0 : index
    %c352 = arith.constant 352 : index
    %103 = vector.load %arg2[%c0_57, %c352] : memref<4x512xf32, #tpu.memory_space<vmem>>, vector<4x32xf32>
    %c0_58 = arith.constant 0 : index
    %c352_59 = arith.constant 352 : index
    %104 = vector.load %arg3[%c0_58, %c352_59] : memref<4x512xf32, #tpu.memory_space<vmem>>, vector<4x32xf32>
    %105 = arith.subf %103, %104 : vector<4x32xf32>
    %cst_60 = arith.constant 9.99999997E-7 : f32
    %106 = vector.broadcast %cst_60 : f32 to vector<4x32xf32>
    %107 = arith.addf %105, %106 : vector<4x32xf32>
    %108 = arith.mulf %107, %107 : vector<4x32xf32>
    %cst_61 = arith.constant dense<0.000000e+00> : vector<4xf32>
    %109 = vector.multi_reduction <add>, %108, %cst_61 [1] : vector<4x32xf32> to vector<4xf32>
    %110 = vector.shape_cast %109 : vector<4xf32> to vector<4x1xf32>
    %111 = arith.maximumf %102, %110 : vector<4x1xf32>
    %c0_62 = arith.constant 0 : index
    %c384 = arith.constant 384 : index
    %112 = vector.load %arg2[%c0_62, %c384] : memref<4x512xf32, #tpu.memory_space<vmem>>, vector<4x32xf32>
    %c0_63 = arith.constant 0 : index
    %c384_64 = arith.constant 384 : index
    %113 = vector.load %arg3[%c0_63, %c384_64] : memref<4x512xf32, #tpu.memory_space<vmem>>, vector<4x32xf32>
    %114 = arith.subf %112, %113 : vector<4x32xf32>
    %cst_65 = arith.constant 9.99999997E-7 : f32
    %115 = vector.broadcast %cst_65 : f32 to vector<4x32xf32>
    %116 = arith.addf %114, %115 : vector<4x32xf32>
    %117 = arith.mulf %116, %116 : vector<4x32xf32>
    %cst_66 = arith.constant dense<0.000000e+00> : vector<4xf32>
    %118 = vector.multi_reduction <add>, %117, %cst_66 [1] : vector<4x32xf32> to vector<4xf32>
    %119 = vector.shape_cast %118 : vector<4xf32> to vector<4x1xf32>
    %120 = arith.maximumf %111, %119 : vector<4x1xf32>
    %c0_67 = arith.constant 0 : index
    %c416 = arith.constant 416 : index
    %121 = vector.load %arg2[%c0_67, %c416] : memref<4x512xf32, #tpu.memory_space<vmem>>, vector<4x32xf32>
    %c0_68 = arith.constant 0 : index
    %c416_69 = arith.constant 416 : index
    %122 = vector.load %arg3[%c0_68, %c416_69] : memref<4x512xf32, #tpu.memory_space<vmem>>, vector<4x32xf32>
    %123 = arith.subf %121, %122 : vector<4x32xf32>
    %cst_70 = arith.constant 9.99999997E-7 : f32
    %124 = vector.broadcast %cst_70 : f32 to vector<4x32xf32>
    %125 = arith.addf %123, %124 : vector<4x32xf32>
    %126 = arith.mulf %125, %125 : vector<4x32xf32>
    %cst_71 = arith.constant dense<0.000000e+00> : vector<4xf32>
    %127 = vector.multi_reduction <add>, %126, %cst_71 [1] : vector<4x32xf32> to vector<4xf32>
    %128 = vector.shape_cast %127 : vector<4xf32> to vector<4x1xf32>
    %129 = arith.maximumf %120, %128 : vector<4x1xf32>
    %c0_72 = arith.constant 0 : index
    %c448 = arith.constant 448 : index
    %130 = vector.load %arg2[%c0_72, %c448] : memref<4x512xf32, #tpu.memory_space<vmem>>, vector<4x32xf32>
    %c0_73 = arith.constant 0 : index
    %c448_74 = arith.constant 448 : index
    %131 = vector.load %arg3[%c0_73, %c448_74] : memref<4x512xf32, #tpu.memory_space<vmem>>, vector<4x32xf32>
    %132 = arith.subf %130, %131 : vector<4x32xf32>
    %cst_75 = arith.constant 9.99999997E-7 : f32
    %133 = vector.broadcast %cst_75 : f32 to vector<4x32xf32>
    %134 = arith.addf %132, %133 : vector<4x32xf32>
    %135 = arith.mulf %134, %134 : vector<4x32xf32>
    %cst_76 = arith.constant dense<0.000000e+00> : vector<4xf32>
    %136 = vector.multi_reduction <add>, %135, %cst_76 [1] : vector<4x32xf32> to vector<4xf32>
    %137 = vector.shape_cast %136 : vector<4xf32> to vector<4x1xf32>
    %138 = arith.maximumf %129, %137 : vector<4x1xf32>
    %c0_77 = arith.constant 0 : index
    %c480 = arith.constant 480 : index
    %139 = vector.load %arg2[%c0_77, %c480] : memref<4x512xf32, #tpu.memory_space<vmem>>, vector<4x32xf32>
    %c0_78 = arith.constant 0 : index
    %c480_79 = arith.constant 480 : index
    %140 = vector.load %arg3[%c0_78, %c480_79] : memref<4x512xf32, #tpu.memory_space<vmem>>, vector<4x32xf32>
    %141 = arith.subf %139, %140 : vector<4x32xf32>
    %cst_80 = arith.constant 9.99999997E-7 : f32
    %142 = vector.broadcast %cst_80 : f32 to vector<4x32xf32>
    %143 = arith.addf %141, %142 : vector<4x32xf32>
    %144 = arith.mulf %143, %143 : vector<4x32xf32>
    %cst_81 = arith.constant dense<0.000000e+00> : vector<4xf32>
    %145 = vector.multi_reduction <add>, %144, %cst_81 [1] : vector<4x32xf32> to vector<4xf32>
    %146 = vector.shape_cast %145 : vector<4xf32> to vector<4x1xf32>
    %147 = arith.maximumf %138, %146 : vector<4x1xf32>
    %c0_82 = arith.constant 0 : index
    %c0_83 = arith.constant 0 : index
    %148 = vector.load %arg5[%c0_82, %c0_83] : memref<4x1xf32, #tpu.memory_space<vmem>>, vector<4x1xf32>
    tpu.vector_store %arg5[%c0_82, %c0_83], %147 {strides = array<i32>} : memref<4x1xf32, #tpu.memory_space<vmem>>, vector<4x1xf32>,
    %c0_i32_84 = arith.constant 0 : i32
    %149 = arith.cmpi eq, %arg1, %c0_i32_84 : i32
    %150 = arith.extui %149 : i1 to i32
    %c0_i32_85 = arith.constant 0 : i32
    %151 = arith.cmpi ne, %150, %c0_i32_85 : i32
    scf.if %151 {
      %c0_86 = arith.constant 0 : index
      %c0_87 = arith.constant 0 : index
      %152 = vector.load %arg5[%c0_86, %c0_87] : memref<4x1xf32, #tpu.memory_space<vmem>>, vector<4x1xf32>
      %c0_88 = arith.constant 0 : index
      %c0_89 = arith.constant 0 : index
      %c0_90 = arith.constant 0 : index
      %153 = vector.load %arg4[%c0_88, %c0_89, %c0_90] : memref<1x4x1xf32, #tpu.memory_space<vmem>>, vector<1x4x1xf32>
      %154 = vector.shape_cast %153 : vector<1x4x1xf32> to vector<4x1xf32>
      %155 = vector.shape_cast %152 : vector<4x1xf32> to vector<1x4x1xf32>
      tpu.vector_store %arg4[%c0_88, %c0_89, %c0_90], %155 {strides = array<i32>} : memref<1x4x1xf32, #tpu.memory_space<vmem>>, vector<1x4x1xf32>,
    } else {
    }
    return
  }
  func.func @transform_0(%arg0: i32, %arg1: i32) -> (i32, i32) {
    %c0_i32 = arith.constant 0 : i32
    return %arg0, %arg1 : i32, i32
  }
  func.func @transform_1(%arg0: i32, %arg1: i32) -> (i32, i32) {
    %c0_i32 = arith.constant 0 : i32
    return %arg0, %arg1 : i32, i32
  }
  func.func @transform_2(%arg0: i32, %arg1: i32) -> (i32, i32, i32) {
    %c0_i32 = arith.constant 0 : i32
    %c0_i32_0 = arith.constant 0 : i32
    %c0_i32_1 = arith.constant 0 : i32
    return %arg0, %c0_i32, %c0_i32_0 : i32, i32, i32
  }
}

</mosaic_0001>

<llo_original>
// kernel: tpu_custom_call.1
$region0: #{tpu_custom_call.1}
  #allocation0 [shape = 'u32[]', space=smem, size = 0x4, offset = 0x4, fixed_abs, tag = 'smem constant byte address 0x4 - core index']
  #allocation1 [shape = 'u32[144,128]{1,0:T(1,128)}', space=vmem, size = 0x12000, scoped, tag = 'internal scratch']
  #allocation2 [shape = 'f32[4,1]{1,0:T(4,128)}', space=vmem, size = 0x800, scoped, tag = 'scratch operand']
  %s0 = inlined_call_operand.hbm [shape: f32[4,512], index: 0, kind: input, shape index: {}]
  %s1 = inlined_call_operand.hbm [shape: f32[4,512], index: 1, kind: input, shape index: {}]
  %s2 = inlined_call_operand.vmem [shape: f32[1,4,1], index: 2, kind: output, shape index: {}]
  %s3 = sld [smem:[#allocation0]]
  $region34: #{tpu_custom_call.1} parent=0
    _
  %s5 = ssub.s32 1, %s3
  %s6 = scalar_select 0, %s5, %s3
  $region1: #{tpu_custom_call.1} parent=0
    #allocation3 [shape = 'u8[8192]{0}', space=vmem, size = 0x2000, scoped, tag = 'input window, operand 0, single buffered']
    #allocation4 [shape = 's32[1]{0}', space=sflag, size = 0x4, scoped, tag = 'scoped memory for tpu_custom_call.1']
    #allocation5 [shape = 'u8[8192]{0}', space=vmem, size = 0x2000, scoped, tag = 'input window, operand 1, single buffered']
    #allocation6 [shape = 's32[1]{0}', space=sflag, size = 0x4, scoped, tag = 'scoped memory for tpu_custom_call.1']
    %7 = vsyncpa [#allocation4], 0
    %8 = vsyncpa [#allocation6], 0
    // Predicated region
    $region2: #{tpu_custom_call.1} parent=1 // pred_check
      _
    $region3: #{tpu_custom_call.1} parent=1 // pred_check_branch
      %10 = sbr.rel (0) target = $region5
    $region4: #{tpu_custom_call.1} parent=1 // pred_region
      %s12 = ssub.s32 256, 256
      %13 = vsyncadd [#allocation4], %s12
      %s15 = sshll.u32 [#allocation3], 4
      %s16 = int_to_ptr.vmem [resolvable:$true] %s15
      %18 = dma.hbm_to_vmem [thread:$0]  %s0, 256, %s16, [#allocation4]
    $region5: #{tpu_custom_call.1} parent=1 // pred_fallthru
      _
    // Predicated region
    $region6: #{tpu_custom_call.1} parent=1 // pred_check
      _
    $region7: #{tpu_custom_call.1} parent=1 // pred_check_branch
      %20 = sbr.rel (0) target = $region9
    $region8: #{tpu_custom_call.1} parent=1 // pred_region
      %s22 = ssub.s32 256, 256
      %23 = vsyncadd [#allocation6], %s22
      %s25 = sshll.u32 [#allocation5], 4
      %s26 = int_to_ptr.vmem [resolvable:$true] %s25
      %28 = dma.hbm_to_vmem [thread:$0]  %s1, 256, %s26, [#allocation6]
    $region9: #{tpu_custom_call.1} parent=1 // pred_fallthru
      _
    // Predicated region
    $region10: #{tpu_custom_call.1} parent=1 // pred_check
      _
    $region11: #{tpu_custom_call.1} parent=1 // pred_check_branch
      %30 = sbr.rel (0) target = $region13
    $region12: #{tpu_custom_call.1} parent=1 // pred_region
      %31 = dma.done [#allocation4], 256
    $region13: #{tpu_custom_call.1} parent=1 // pred_fallthru
      _
    // Predicated region
    $region14: #{tpu_custom_call.1} parent=1 // pred_check
      _
    $region15: #{tpu_custom_call.1} parent=1 // pred_check_branch
      %33 = sbr.rel (0) target = $region17
    $region16: #{tpu_custom_call.1} parent=1 // pred_region
      %34 = dma.done [#allocation6], 256
    $region17: #{tpu_custom_call.1} parent=1 // pred_fallthru
      _
    %p35 = scmp.eq.s32.totalorder 0, 0
    // Predicated region
    $region18: #{tpu_custom_call.1} parent=1 // pred_check
      %p36 = pneg %p35
    $region19: #{tpu_custom_call.1} parent=1 // pred_check_branch
      %38 = sbr.rel (%p36) target = $region21
    $region20: #{tpu_custom_call.1} parent=1 // pred_region
      %vm39 = vcmask 3072
      %40 = vst.msk [vmem:[#allocation2] sm:$0xf] %vm39, -inf
    $region21: #{tpu_custom_call.1} parent=1 // pred_fallthru
      _
    %v41 = vld [vmem:[#allocation2] sm:$0xf]
    %v42 = vld [vmem:[#allocation3] sm:$0xf]
    %v43 = vld [vmem:[#allocation5] sm:$0xf]
    %v44 = vsub.f32 %v42, %v43
    %v45 = vadd.f32 %v44, 1e-06
    %v46 = vmul.f32 %v45, %v45
    %vm47 = vcmask 257024
    %v48 = vsel %vm47, %v46, 0.0
    %49 = vadd.xlane.f32.xlu0 %v48
    %v50 = vpop.xlane.xlu0 %49
    %v51 = vmax.f32 %v41, %v50
    %53 = vrot.lane.b32.xlu0 %v46, 96
    %v54 = vpop.permute.xlu0 %53
    %v56 = vsel %vm47, %v54, 0.0
    %57 = vadd.xlane.f32.xlu0 %v56
    %v58 = vpop.xlane.xlu0 %57
    %v59 = vmax.f32 %v51, %v58
    %60 = vrot.lane.b32.xlu0 %v46, 64
    %v61 = vpop.permute.xlu0 %60
    %v63 = vsel %vm47, %v61, 0.0
    %64 = vadd.xlane.f32.xlu0 %v63
    %v65 = vpop.xlane.xlu0 %64
    %v66 = vmax.f32 %v59, %v65
    %67 = vrot.lane.b32.xlu0 %v46, 32
    %v68 = vpop.permute.xlu0 %67
    %v70 = vsel %vm47, %v68, 0.0
    %71 = vadd.xlane.f32.xlu0 %v70
    %v72 = vpop.xlane.xlu0 %71
    %v73 = vmax.f32 %v66, %v72
    %v74 = vld [vmem:[#allocation3 + $0x4] sm:$0xf]
    %v75 = vld [vmem:[#allocation5 + $0x4] sm:$0xf]
    %v76 = vsub.f32 %v74, %v75
    %v77 = vadd.f32 %v76, 1e-06
    %v78 = vmul.f32 %v77, %v77
    %v79 = vsel %vm47, %v78, 0.0
    %80 = vadd.xlane.f32.xlu0 %v79
    %v81 = vpop.xlane.xlu0 %80
    %v82 = vmax.f32 %v73, %v81
    %84 = vrot.lane.b32.xlu0 %v78, 96
    %v85 = vpop.permute.xlu0 %84
    %v87 = vsel %vm47, %v85, 0.0
    %88 = vadd.xlane.f32.xlu0 %v87
    %v89 = vpop.xlane.xlu0 %88
    %v90 = vmax.f32 %v82, %v89
    %91 = vrot.lane.b32.xlu0 %v78, 64
    %v92 = vpop.permute.xlu0 %91
    %v94 = vsel %vm47, %v92, 0.0
    %95 = vadd.xlane.f32.xlu0 %v94
    %v96 = vpop.xlane.xlu0 %95
    %v97 = vmax.f32 %v90, %v96
    %98 = vrot.lane.b32.xlu0 %v78, 32
    %v99 = vpop.permute.xlu0 %98
    %v101 = vsel %vm47, %v99, 0.0
    %102 = vadd.xlane.f32.xlu0 %v101
    %v103 = vpop.xlane.xlu0 %102
    %v104 = vmax.f32 %v97, %v103
    %v105 = vld [vmem:[#allocation3 + $0x8] sm:$0xf]
    %v106 = vld [vmem:[#allocation5 + $0x8] sm:$0xf]
    %v107 = vsub.f32 %v105, %v106
    %v108 = vadd.f32 %v107, 1e-06
    %v109 = vmul.f32 %v108, %v108
    %v110 = vsel %vm47, %v109, 0.0
    %111 = vadd.xlane.f32.xlu0 %v110
    %v112 = vpop.xlane.xlu0 %111
    %v113 = vmax.f32 %v104, %v112
    %115 = vrot.lane.b32.xlu0 %v109, 96
    %v116 = vpop.permute.xlu0 %115
    %v118 = vsel %vm47, %v116, 0.0
    %119 = vadd.xlane.f32.xlu0 %v118
    %v120 = vpop.xlane.xlu0 %119
    %v121 = vmax.f32 %v113, %v120
    %122 = vrot.lane.b32.xlu0 %v109, 64
    %v123 = vpop.permute.xlu0 %122
    %v125 = vsel %vm47, %v123, 0.0
    %126 = vadd.xlane.f32.xlu0 %v125
    %v127 = vpop.xlane.xlu0 %126
    %v128 = vmax.f32 %v121, %v127
    %129 = vrot.lane.b32.xlu0 %v109, 32
    %v130 = vpop.permute.xlu0 %129
    %v132 = vsel %vm47, %v130, 0.0
    %133 = vadd.xlane.f32.xlu0 %v132
    %v134 = vpop.xlane.xlu0 %133
    %v135 = vmax.f32 %v128, %v134
    %v136 = vld [vmem:[#allocation3 + $0xc] sm:$0xf]
    %v137 = vld [vmem:[#allocation5 + $0xc] sm:$0xf]
    %v138 = vsub.f32 %v136, %v137
    %v139 = vadd.f32 %v138, 1e-06
    %v140 = vmul.f32 %v139, %v139
    %v141 = vsel %vm47, %v140, 0.0
    %142 = vadd.xlane.f32.xlu0 %v141
    %v143 = vpop.xlane.xlu0 %142
    %v144 = vmax.f32 %v135, %v143
    %146 = vrot.lane.b32.xlu0 %v140, 96
    %v147 = vpop.permute.xlu0 %146
    %v149 = vsel %vm47, %v147, 0.0
    %150 = vadd.xlane.f32.xlu0 %v149
    %v151 = vpop.xlane.xlu0 %150
    %v152 = vmax.f32 %v144, %v151
    %153 = vrot.lane.b32.xlu0 %v140, 64
    %v154 = vpop.permute.xlu0 %153
    %v156 = vsel %vm47, %v154, 0.0
    %157 = vadd.xlane.f32.xlu0 %v156
    %v158 = vpop.xlane.xlu0 %157
    %v159 = vmax.f32 %v152, %v158
    %160 = vrot.lane.b32.xlu0 %v140, 32
    %v161 = vpop.permute.xlu0 %160
    %v163 = vsel %vm47, %v161, 0.0
    %164 = vadd.xlane.f32.xlu0 %v163
    %v165 = vpop.xlane.xlu0 %164
    %v166 = vmax.f32 %v159, %v165
    %vm167 = vcmask 3072
    %168 = vst.msk [vmem:[#allocation2] sm:$0xf] %vm167, %v166
    // Predicated region
    $region22: #{tpu_custom_call.1} parent=1 // pred_check
      %p169 = pneg %p35
    $region23: #{tpu_custom_call.1} parent=1 // pred_check_branch
      %171 = sbr.rel (%p169) target = $region25
    $region24: #{tpu_custom_call.1} parent=1 // pred_region
      %v172 = vld [vmem:[#allocation2] sm:$0xf]
      %173 = vst.msk [vmem:[%s2] sm:$0xf] %vm167, %v172
    $region25: #{tpu_custom_call.1} parent=1 // pred_fallthru
      _
    // Predicated region
    $region26: #{tpu_custom_call.1} parent=1 // pred_check
      _
    $region27: #{tpu_custom_call.1} parent=1 // pred_check_branch
      %175 = sbr.rel (0) target = $region29
    $region28: #{tpu_custom_call.1} parent=1 // pred_region
      _
    $region29: #{tpu_custom_call.1} parent=1 // pred_fallthru
      _
    // Predicated region
    $region30: #{tpu_custom_call.1} parent=1 // pred_check
      _
    $region31: #{tpu_custom_call.1} parent=1 // pred_check_branch
      %177 = sbr.rel (0) target = $region33
    $region32: #{tpu_custom_call.1} parent=1 // pred_region
      _
    $region33: #{tpu_custom_call.1} parent=1 // pred_fallthru
      _
    %178 = vsyncpa [#allocation4], 1
    %179 = vsyncpa [#allocation6], 1

</llo_original>
